<compile_context>
chip_gen: v7x
topology: tpu7x:2x2x1
jax: 0.10.0
libtpu: 0.0.40
codegen_flags: <defaults>
</compile_context>

<pallas_src>
import functools

import jax
import jax.numpy as jnp
from jax.experimental import pallas as pl
from jax.experimental.pallas import tpu as pltpu

_LANE = 128
_SUBLANE = 8
_MAX_TM = 256  # keeps (TM, 128) f32 intermediate at <= 32 vregs


def _round_up(a, m):
    return (a + m - 1) // m * m


def _mlp_kernel(x_ref, w1_ref, b1_ref, w2_ref, b2_ref, w3_ref, b3_ref, o_ref):
    """Fused fc1+ReLU -> (dropout=identity) -> fc2+ReLU -> output, one batch tile."""
    x = x_ref[...]  # (TM, K) bf16

    # fc1 + ReLU: bf16 MXU matmul, f32 accumulation; bias/ReLU in f32.
    h1 = jnp.dot(x, w1_ref[...], preferred_element_type=jnp.float32) + b1_ref[...]
    h1 = jnp.maximum(h1, 0.0)

    # Dropout(0.5): identity at inference time.
    # TODO(synk): training-mode stochastic dropout (pltpu.prng_random_bits) not wired in.

    # fc2 + ReLU
    h2 = jnp.dot(h1.astype(jnp.bfloat16), w2_ref[...],
                 preferred_element_type=jnp.float32) + b2_ref[...]
    h2 = jnp.maximum(h2, 0.0)

    # output linear (no activation); output dim is 128-padded => lane-dense store.
    out = jnp.dot(h2.astype(jnp.bfloat16), w3_ref[...],
                  preferred_element_type=jnp.float32) + b3_ref[...]
    o_ref[...] = out.astype(o_ref.dtype)


@jax.jit
def combined_model_forward(x, w1, b1, w2, b2, w3, b3):
    """Batch-tiled fused MLP forward. x:(N,K) f32; w_i:(in,out); b_i:(1,out)."""
    n, k = x.shape
    h1_dim = w1.shape[1]          # 128
    h2_dim = w2.shape[1]          # 64
    c = w3.shape[1]               # num_classes
    c_pad = _round_up(c, _LANE)   # lane-dense output width

    tm = min(_MAX_TM, _round_up(n, _SUBLANE))
    n_pad = _round_up(n, tm)

    # Pad batch rows (zeros) and the output-feature dim of w3/b3 to 128 lanes.
    x_p = jnp.zeros((n_pad, k), jnp.bfloat16).at[:n, :].set(x.astype(jnp.bfloat16))
    w3_p = jnp.zeros((h2_dim, c_pad), jnp.float32).at[:, :c].set(w3)
    b3_p = jnp.zeros((1, c_pad), jnp.float32).at[:, :c].set(b3)

    # bf16 MXU operands (weights are tiny; x is the dominant HBM byte stream).
    w1_b = w1.astype(jnp.bfloat16)
    w2_b = w2.astype(jnp.bfloat16)
    w3_b = w3_p.astype(jnp.bfloat16)
    b1_f = b1.astype(jnp.float32)
    b2_f = b2.astype(jnp.float32)

    grid = (n_pad // tm,)

    flops = 2 * n_pad * (k * h1_dim + h1_dim * h2_dim + h2_dim * c_pad)
    bytes_accessed = (x_p.size * 2 + n_pad * c_pad * 4
                      + w1_b.size * 2 + w2_b.size * 2 + w3_b.size * 2
                      + b1_f.size * 4 + b2_f.size * 4 + b3_p.size * 4)

    out = pl.pallas_call(
        _mlp_kernel,
        out_shape=jax.ShapeDtypeStruct((n_pad, c_pad), jnp.float32),
        grid=grid,
        in_specs=[
            pl.BlockSpec((tm, k), lambda i: (i, 0)),          # x tile
            pl.BlockSpec((k, h1_dim), lambda i: (0, 0)),      # w1 (broadcast)
            pl.BlockSpec((1, h1_dim), lambda i: (0, 0)),      # b1
            pl.BlockSpec((h1_dim, h2_dim), lambda i: (0, 0)), # w2
            pl.BlockSpec((1, h2_dim), lambda i: (0, 0)),      # b2
            pl.BlockSpec((h2_dim, c_pad), lambda i: (0, 0)),  # w3 (padded)
            pl.BlockSpec((1, c_pad), lambda i: (0, 0)),       # b3 (padded)
        ],
        out_specs=pl.BlockSpec((tm, c_pad), lambda i: (i, 0)),
        compiler_params=pltpu.CompilerParams(
            dimension_semantics=("parallel",),
            vmem_limit_bytes=64 * 1024 * 1024,
        ),
        cost_estimate=pl.CostEstimate(
            flops=flops, transcendentals=0, bytes_accessed=bytes_accessed),
    )(x_p, w1_b, b1_f, w2_b, b2_f, w3_b, b3_p)

    return out[:n, :c]


def init_params(key, text_input_size, image_input_size, num_classes):
    """Deterministic init mimicking nn.Linear default (U[-1/sqrt(fan_in), +...])."""
    in_dim = text_input_size + image_input_size
    dims = [(in_dim, 128), (128, 64), (64, num_classes)]
    params = []
    for (fan_in, fan_out) in dims:
        key, kw, kb = jax.random.split(key, 3)
        bound = 1.0 / (fan_in ** 0.5)
        w = jax.random.uniform(kw, (fan_in, fan_out), jnp.float32, -bound, bound)
        b = jax.random.uniform(kb, (1, fan_out), jnp.float32, -bound, bound)
        params += [w, b]
    return params  # [w1, b1, w2, b2, w3, b3]


if __name__ == "__main__":
    key = jax.random.PRNGKey(0)

    # Small shapes consistent with the module's forward.
    batch = 2
    text_input_size = 24
    image_input_size = 40          # combined feature dim = 64
    num_classes = 4

    key, kx = jax.random.split(key)
    combined_features = jax.random.normal(
        kx, (batch, text_input_size + image_input_size), jnp.float32)

    w1, b1, w2, b2, w3, b3 = init_params(
        key, text_input_size, image_input_size, num_classes)

    out = combined_model_forward(combined_features, w1, b1, w2, b2, w3, b3)
    out = jax.block_until_ready(out)
    assert out.shape == (batch, num_classes)

    # Pure-JAX reference with matching bf16 operands / f32 accumulation.
    xb = combined_features.astype(jnp.bfloat16)
    h1 = jnp.maximum(
        jnp.dot(xb, w1.astype(jnp.bfloat16), preferred_element_type=jnp.float32) + b1, 0.0)
    h2 = jnp.maximum(
        jnp.dot(h1.astype(jnp.bfloat16), w2.astype(jnp.bfloat16),
                preferred_element_type=jnp.float32) + b2, 0.0)
    ref = jnp.dot(h2.astype(jnp.bfloat16), w3.astype(jnp.bfloat16),
                  preferred_element_type=jnp.float32) + b3
    assert jnp.allclose(out, ref, atol=2e-3, rtol=2e-3), (out, ref)

    # Loose sanity check against the f32 reference (bf16 rounding error only).
    h1f = jnp.maximum(combined_features @ w1 + b1, 0.0)
    h2f = jnp.maximum(h1f @ w2 + b2, 0.0)
    reff = h2f @ w3 + b3
    assert jnp.allclose(out, reff, atol=1e-1, rtol=1e-1)

    print("KERNEL_OK")
</pallas_src>

<mosaic_0001>
module attributes {stable_mosaic.version = 11 : i64} {
  func.func @_mlp_kernel(%arg0: i32, %arg1: memref<8x64xbf16, #tpu.memory_space<vmem>>, %arg2: memref<64x128xbf16, #tpu.memory_space<vmem>>, %arg3: memref<1x128xf32, #tpu.memory_space<vmem>>, %arg4: memref<128x64xbf16, #tpu.memory_space<vmem>>, %arg5: memref<1x64xf32, #tpu.memory_space<vmem>>, %arg6: memref<64x128xbf16, #tpu.memory_space<vmem>>, %arg7: memref<1x128xf32, #tpu.memory_space<vmem>>, %arg8: memref<8x128xf32, #tpu.memory_space<vmem>>) attributes {dimension_semantics = [#tpu.dimension_semantics<parallel>], iteration_bounds = array<i64: 1>, scalar_prefetch = 0 : i64, scratch_operands = 0 : i64, tpu.core_type = #tpu.core_type<tc>, window_params = [{transform_indices = @transform_0, window_bounds = array<i64: 8, 64>}, {pipeline_mode = #tpu.pipeline_mode<synchronous>, transform_indices = @transform_1, window_bounds = array<i64: 64, 128>}, {pipeline_mode = #tpu.pipeline_mode<synchronous>, transform_indices = @transform_2, window_bounds = array<i64: 1, 128>}, {pipeline_mode = #tpu.pipeline_mode<synchronous>, transform_indices = @transform_3, window_bounds = array<i64: 128, 64>}, {pipeline_mode = #tpu.pipeline_mode<synchronous>, transform_indices = @transform_4, window_bounds = array<i64: 1, 64>}, {pipeline_mode = #tpu.pipeline_mode<synchronous>, transform_indices = @transform_5, window_bounds = array<i64: 64, 128>}, {pipeline_mode = #tpu.pipeline_mode<synchronous>, transform_indices = @transform_6, window_bounds = array<i64: 1, 128>}, {transform_indices = @transform_7, window_bounds = array<i64: 8, 128>}]} {
    %c0 = arith.constant 0 : index
    %c0_0 = arith.constant 0 : index
    %0 = vector.load %arg1[%c0, %c0_0] : memref<8x64xbf16, #tpu.memory_space<vmem>>, vector<8x64xbf16>
    %c0_1 = arith.constant 0 : index
    %c0_2 = arith.constant 0 : index
    %1 = vector.load %arg2[%c0_1, %c0_2] : memref<64x128xbf16, #tpu.memory_space<vmem>>, vector<64x128xbf16>
    %cst = arith.constant dense<0.000000e+00> : vector<8x128xf32>
    %2 = tpu.matmul %0, %1, %cst {dimension_numbers = #tpu.dot_dimension_numbers<[1], [0], [0], [1], [0, 0, 1, 1], [], []>} : vector<8x64xbf16>, vector<64x128xbf16>, vector<8x128xf32> -> vector<8x128xf32>
    %c0_3 = arith.constant 0 : index
    %c0_4 = arith.constant 0 : index
    %3 = vector.load %arg3[%c0_3, %c0_4] : memref<1x128xf32, #tpu.memory_space<vmem>>, vector<1x128xf32>
    %4 = vector.broadcast %3 : vector<1x128xf32> to vector<8x128xf32>
    %5 = arith.addf %2, %4 : vector<8x128xf32>
    %cst_5 = arith.constant 0.000000e+00 : f32
    %6 = vector.broadcast %cst_5 : f32 to vector<8x128xf32>
    %7 = arith.maximumf %5, %6 : vector<8x128xf32>
    %8 = arith.truncf %7 : vector<8x128xf32> to vector<8x128xbf16>
    %c0_6 = arith.constant 0 : index
    %c0_7 = arith.constant 0 : index
    %9 = vector.load %arg4[%c0_6, %c0_7] : memref<128x64xbf16, #tpu.memory_space<vmem>>, vector<128x64xbf16>
    %cst_8 = arith.constant dense<0.000000e+00> : vector<8x64xf32>
    %10 = tpu.matmul %8, %9, %cst_8 {dimension_numbers = #tpu.dot_dimension_numbers<[1], [0], [0], [1], [0, 0, 1, 1], [], []>} : vector<8x128xbf16>, vector<128x64xbf16>, vector<8x64xf32> -> vector<8x64xf32>
    %c0_9 = arith.constant 0 : index
    %c0_10 = arith.constant 0 : index
    %11 = vector.load %arg5[%c0_9, %c0_10] : memref<1x64xf32, #tpu.memory_space<vmem>>, vector<1x64xf32>
    %12 = vector.broadcast %11 : vector<1x64xf32> to vector<8x64xf32>
    %13 = arith.addf %10, %12 : vector<8x64xf32>
    %cst_11 = arith.constant 0.000000e+00 : f32
    %14 = vector.broadcast %cst_11 : f32 to vector<8x64xf32>
    %15 = arith.maximumf %13, %14 : vector<8x64xf32>
    %16 = arith.truncf %15 : vector<8x64xf32> to vector<8x64xbf16>
    %c0_12 = arith.constant 0 : index
    %c0_13 = arith.constant 0 : index
    %17 = vector.load %arg6[%c0_12, %c0_13] : memref<64x128xbf16, #tpu.memory_space<vmem>>, vector<64x128xbf16>
    %cst_14 = arith.constant dense<0.000000e+00> : vector<8x128xf32>
    %18 = tpu.matmul %16, %17, %cst_14 {dimension_numbers = #tpu.dot_dimension_numbers<[1], [0], [0], [1], [0, 0, 1, 1], [], []>} : vector<8x64xbf16>, vector<64x128xbf16>, vector<8x128xf32> -> vector<8x128xf32>
    %c0_15 = arith.constant 0 : index
    %c0_16 = arith.constant 0 : index
    %19 = vector.load %arg7[%c0_15, %c0_16] : memref<1x128xf32, #tpu.memory_space<vmem>>, vector<1x128xf32>
    %20 = vector.broadcast %19 : vector<1x128xf32> to vector<8x128xf32>
    %21 = arith.addf %18, %20 : vector<8x128xf32>
    %c0_17 = arith.constant 0 : index
    %c0_18 = arith.constant 0 : index
    %22 = vector.load %arg8[%c0_17, %c0_18] : memref<8x128xf32, #tpu.memory_space<vmem>>, vector<8x128xf32>
    tpu.vector_store %arg8[%c0_17, %c0_18], %21 {strides = array<i32>} : memref<8x128xf32, #tpu.memory_space<vmem>>, vector<8x128xf32>,
    return
  }
  func.func @transform_0(%arg0: i32) -> (i32, i32) {
    %c0_i32 = arith.constant 0 : i32
    %c0_i32_0 = arith.constant 0 : i32
    return %arg0, %c0_i32 : i32, i32
  }
  func.func @transform_1(%arg0: i32) -> (i32, i32) {
    %c0_i32 = arith.constant 0 : i32
    %c0_i32_0 = arith.constant 0 : i32
    %c0_i32_1 = arith.constant 0 : i32
    return %c0_i32, %c0_i32_0 : i32, i32
  }
  func.func @transform_2(%arg0: i32) -> (i32, i32) {
    %c0_i32 = arith.constant 0 : i32
    %c0_i32_0 = arith.constant 0 : i32
    %c0_i32_1 = arith.constant 0 : i32
    return %c0_i32, %c0_i32_0 : i32, i32
  }
  func.func @transform_3(%arg0: i32) -> (i32, i32) {
    %c0_i32 = arith.constant 0 : i32
    %c0_i32_0 = arith.constant 0 : i32
    %c0_i32_1 = arith.constant 0 : i32
    return %c0_i32, %c0_i32_0 : i32, i32
  }
  func.func @transform_4(%arg0: i32) -> (i32, i32) {
    %c0_i32 = arith.constant 0 : i32
    %c0_i32_0 = arith.constant 0 : i32
    %c0_i32_1 = arith.constant 0 : i32
    return %c0_i32, %c0_i32_0 : i32, i32
  }
  func.func @transform_5(%arg0: i32) -> (i32, i32) {
    %c0_i32 = arith.constant 0 : i32
    %c0_i32_0 = arith.constant 0 : i32
    %c0_i32_1 = arith.constant 0 : i32
    return %c0_i32, %c0_i32_0 : i32, i32
  }
  func.func @transform_6(%arg0: i32) -> (i32, i32) {
    %c0_i32 = arith.constant 0 : i32
    %c0_i32_0 = arith.constant 0 : i32
    %c0_i32_1 = arith.constant 0 : i32
    return %c0_i32, %c0_i32_0 : i32, i32
  }
  func.func @transform_7(%arg0: i32) -> (i32, i32) {
    %c0_i32 = arith.constant 0 : i32
    %c0_i32_0 = arith.constant 0 : i32
    return %arg0, %c0_i32 : i32, i32
  }
}

</mosaic_0001>

<llo_original>
// kernel: combined_model_forward.1
$region0: #{combined_model_forward.1}
  #allocation0 [shape = 'u32[]', space=smem, size = 0x4, offset = 0x4, fixed_abs, tag = 'smem constant byte address 0x4 - core index']
  #allocation1 [shape = 'u32[144,128]{1,0:T(1,128)}', space=vmem, size = 0x12000, scoped, tag = 'internal scratch']
  %s0 = inlined_call_operand.hbm [shape: bf16[8,64], index: 0, kind: input, shape index: {}]
  %s1 = inlined_call_operand.hbm [shape: bf16[64,128], index: 1, kind: input, shape index: {}]
  %s2 = inlined_call_operand.hbm [shape: f32[1,128], index: 2, kind: input, shape index: {}]
  %s3 = inlined_call_operand.hbm [shape: bf16[128,64], index: 3, kind: input, shape index: {}]
  %s4 = inlined_call_operand.hbm [shape: f32[1,64], index: 4, kind: input, shape index: {}]
  %s5 = inlined_call_operand.hbm [shape: bf16[64,128], index: 5, kind: input, shape index: {}]
  %s6 = inlined_call_operand.hbm [shape: f32[1,128], index: 6, kind: input, shape index: {}]
  %s7 = inlined_call_operand.hbm [shape: f32[8,128], index: 7, kind: output, shape index: {}]
  %s8 = sld [smem:[#allocation0]]
  $region66: #{combined_model_forward.1} parent=0
    _
  %s10 = ssub.s32 1, %s8
  %s11 = scalar_select 0, %s10, %s8
  $region1: #{combined_model_forward.1} parent=0
    #allocation2 [shape = 'u8[2048]{0}', space=vmem, size = 0x800, scoped, tag = 'input window, operand 0, single buffered']
    #allocation3 [shape = 's32[1]{0}', space=sflag, size = 0x4, scoped, tag = 'scoped memory for combined_model_forward.1']
    #allocation4 [shape = 's32[1]{0}', space=sflag, size = 0x4, scoped, tag = 'scoped memory for combined_model_forward.1']
    #allocation5 [shape = 'u8[16384]{0}', space=vmem, size = 0x4000, scoped, tag = 'input window, operand 1, single buffered']
    #allocation6 [shape = 's32[1]{0}', space=sflag, size = 0x4, scoped, tag = 'scoped memory for combined_model_forward.1']
    #allocation7 [shape = 'u8[512]{0}', space=vmem, size = 0x400, scoped, tag = 'input window, operand 2, single buffered']
    #allocation8 [shape = 'u8[32768]{0}', space=vmem, size = 0x8000, scoped, tag = 'input window, operand 3, single buffered']
    #allocation9 [shape = 's32[1]{0}', space=sflag, size = 0x4, scoped, tag = 'scoped memory for combined_model_forward.1']
    #allocation10 [shape = 'u8[512]{0}', space=vmem, size = 0x400, scoped, tag = 'input window, operand 4, single buffered']
    #allocation11 [shape = 'u8[16384]{0}', space=vmem, size = 0x4000, scoped, tag = 'input window, operand 5, single buffered']
    #allocation12 [shape = 's32[1]{0}', space=sflag, size = 0x4, scoped, tag = 'scoped memory for combined_model_forward.1']
    #allocation13 [shape = 'u8[512]{0}', space=vmem, size = 0x400, scoped, tag = 'input window, operand 6, single buffered']
    #allocation14 [shape = 'u8[4096]{0}', space=vmem, size = 0x1000, scoped, tag = 'output window, operand 0, single buffered']
    %12 = vsyncpa [#allocation3], 0
    %13 = vsyncpa [#allocation6], 0
    %14 = vsyncpa [#allocation9], 0
    %15 = vsyncpa [#allocation12], 0
    %16 = vsyncpa [#allocation4], 0
    // Predicated region
    $region2: #{combined_model_forward.1} parent=1 // pred_check
      _
    $region3: #{combined_model_forward.1} parent=1 // pred_check_branch
      %18 = sbr.rel (0) target = $region5
    $region4: #{combined_model_forward.1} parent=1 // pred_region
      %s20 = ssub.s32 64, 64
      %21 = vsyncadd [#allocation3], %s20
      %s23 = sshll.u32 [#allocation2], 4
      %s24 = int_to_ptr.vmem [resolvable:$true] %s23
      %26 = dma.hbm_to_vmem [thread:$0]  %s0, 64, %s24, [#allocation3]
    $region5: #{combined_model_forward.1} parent=1 // pred_fallthru
      _
    // Predicated region
    $region6: #{combined_model_forward.1} parent=1 // pred_check
      _
    $region7: #{combined_model_forward.1} parent=1 // pred_check_branch
      %28 = sbr.rel (0) target = $region9
    $region8: #{combined_model_forward.1} parent=1 // pred_region
      %s30 = ssub.s32 512, 512
      %31 = vsyncadd [#allocation6], %s30
      %s32 = sshll.u32 [#allocation5], 4
      %s33 = int_to_ptr.vmem [resolvable:$true] %s32
      %38 = dma.hbm_to_vmem [thread:$0]  %s1, 512, %s33, [#allocation6], 64, 64, 4
    $region9: #{combined_model_forward.1} parent=1 // pred_fallthru
      _
    // Predicated region
    $region10: #{combined_model_forward.1} parent=1 // pred_check
      _
    $region11: #{combined_model_forward.1} parent=1 // pred_check_branch
      %40 = sbr.rel (0) target = $region13
    $region12: #{combined_model_forward.1} parent=1 // pred_region
      %s42 = ssub.s32 16, 16
      %43 = vsyncadd [#allocation6], %s42
      %s45 = sshll.u32 [#allocation7], 4
      %s46 = int_to_ptr.vmem [resolvable:$true] %s45
      %48 = dma.hbm_to_vmem [thread:$0]  %s2, 16, %s46, [#allocation6]
    $region13: #{combined_model_forward.1} parent=1 // pred_fallthru
      _
    // Predicated region
    $region14: #{combined_model_forward.1} parent=1 // pred_check
      _
    $region15: #{combined_model_forward.1} parent=1 // pred_check_branch
      %50 = sbr.rel (0) target = $region17
    $region16: #{combined_model_forward.1} parent=1 // pred_region
      %s52 = ssub.s32 1024, 1024
      %53 = vsyncadd [#allocation9], %s52
      %s54 = sshll.u32 [#allocation8], 4
      %s55 = int_to_ptr.vmem [resolvable:$true] %s54
      %60 = dma.hbm_to_vmem [thread:$0]  %s3, 1024, %s55, [#allocation9], 64, 64, 4
    $region17: #{combined_model_forward.1} parent=1 // pred_fallthru
      _
    // Predicated region
    $region18: #{combined_model_forward.1} parent=1 // pred_check
      _
    $region19: #{combined_model_forward.1} parent=1 // pred_check_branch
      %62 = sbr.rel (0) target = $region21
    $region20: #{combined_model_forward.1} parent=1 // pred_region
      %s64 = ssub.s32 16, 16
      %65 = vsyncadd [#allocation9], %s64
      %s67 = sshll.u32 [#allocation10], 4
      %s68 = int_to_ptr.vmem [resolvable:$true] %s67
      %70 = dma.hbm_to_vmem [thread:$0]  %s4, 16, %s68, [#allocation9]
    $region21: #{combined_model_forward.1} parent=1 // pred_fallthru
      _
    // Predicated region
    $region22: #{combined_model_forward.1} parent=1 // pred_check
      _
    $region23: #{combined_model_forward.1} parent=1 // pred_check_branch
      %72 = sbr.rel (0) target = $region25
    $region24: #{combined_model_forward.1} parent=1 // pred_region
      %s74 = ssub.s32 512, 512
      %75 = vsyncadd [#allocation12], %s74
      %s76 = sshll.u32 [#allocation11], 4
      %s77 = int_to_ptr.vmem [resolvable:$true] %s76
      %82 = dma.hbm_to_vmem [thread:$0]  %s5, 512, %s77, [#allocation12], 64, 64, 4
    $region25: #{combined_model_forward.1} parent=1 // pred_fallthru
      _
    // Predicated region
    $region26: #{combined_model_forward.1} parent=1 // pred_check
      _
    $region27: #{combined_model_forward.1} parent=1 // pred_check_branch
      %84 = sbr.rel (0) target = $region29
    $region28: #{combined_model_forward.1} parent=1 // pred_region
      %s86 = ssub.s32 16, 16
      %87 = vsyncadd [#allocation12], %s86
      %s89 = sshll.u32 [#allocation13], 4
      %s90 = int_to_ptr.vmem [resolvable:$true] %s89
      %92 = dma.hbm_to_vmem [thread:$0]  %s6, 16, %s90, [#allocation12]
    $region29: #{combined_model_forward.1} parent=1 // pred_fallthru
      _
    // Predicated region
    $region30: #{combined_model_forward.1} parent=1 // pred_check
      _
    $region31: #{combined_model_forward.1} parent=1 // pred_check_branch
      %94 = sbr.rel (0) target = $region33
    $region32: #{combined_model_forward.1} parent=1 // pred_region
      %95 = dma.done [#allocation3], 64
    $region33: #{combined_model_forward.1} parent=1 // pred_fallthru
      _
    // Predicated region
    $region34: #{combined_model_forward.1} parent=1 // pred_check
      _
    $region35: #{combined_model_forward.1} parent=1 // pred_check_branch
      %97 = sbr.rel (0) target = $region37
    $region36: #{combined_model_forward.1} parent=1 // pred_region
      %98 = dma.done [#allocation6], 512
    $region37: #{combined_model_forward.1} parent=1 // pred_fallthru
      _
    // Predicated region
    $region38: #{combined_model_forward.1} parent=1 // pred_check
      _
    $region39: #{combined_model_forward.1} parent=1 // pred_check_branch
      %100 = sbr.rel (0) target = $region41
    $region40: #{combined_model_forward.1} parent=1 // pred_region
      %101 = dma.done [#allocation6], 16
    $region41: #{combined_model_forward.1} parent=1 // pred_fallthru
      _
    // Predicated region
    $region42: #{combined_model_forward.1} parent=1 // pred_check
      _
    $region43: #{combined_model_forward.1} parent=1 // pred_check_branch
      %103 = sbr.rel (0) target = $region45
    $region44: #{combined_model_forward.1} parent=1 // pred_region
      %104 = dma.done [#allocation9], 1024
    $region45: #{combined_model_forward.1} parent=1 // pred_fallthru
      _
    // Predicated region
    $region46: #{combined_model_forward.1} parent=1 // pred_check
      _
    $region47: #{combined_model_forward.1} parent=1 // pred_check_branch
      %106 = sbr.rel (0) target = $region49
    $region48: #{combined_model_forward.1} parent=1 // pred_region
      %107 = dma.done [#allocation9], 16
    $region49: #{combined_model_forward.1} parent=1 // pred_fallthru
      _
    // Predicated region
    $region50: #{combined_model_forward.1} parent=1 // pred_check
      _
    $region51: #{combined_model_forward.1} parent=1 // pred_check_branch
      %109 = sbr.rel (0) target = $region53
    $region52: #{combined_model_forward.1} parent=1 // pred_region
      %110 = dma.done [#allocation12], 512
    $region53: #{combined_model_forward.1} parent=1 // pred_fallthru
      _
    // Predicated region
    $region54: #{combined_model_forward.1} parent=1 // pred_check
      _
    $region55: #{combined_model_forward.1} parent=1 // pred_check_branch
      %112 = sbr.rel (0) target = $region57
    $region56: #{combined_model_forward.1} parent=1 // pred_region
      %113 = dma.done [#allocation12], 16
    $region57: #{combined_model_forward.1} parent=1 // pred_fallthru
      _
    %v115 = vld [vmem:[#allocation2] sm:$0xf]
    %v116 = vld [vmem:[#allocation5] sm:$0xf]
    %v117 = vld [vmem:[#allocation5 + $0x4] sm:$0xf]
    %v118 = vld [vmem:[#allocation5 + $0x8] sm:$0xf]
    %v119 = vld [vmem:[#allocation5 + $0xc] sm:$0xf]
    %v120 = vld [vmem:[#allocation5 + $0x10] sm:$0xf]
    %v121 = vld [vmem:[#allocation5 + $0x14] sm:$0xf]
    %v122 = vld [vmem:[#allocation5 + $0x18] sm:$0xf]
    %v123 = vld [vmem:[#allocation5 + $0x1c] sm:$0xf]
    %v124 = vld [vmem:[#allocation7] sm:$0x1]
    %v126 = vlaneseq
    %v127 = vshrl.u32 %v126, 7
    %v128 = vsub.s32 0, %v127
    %v129 = vrot.slane %v124, %v128
    %v139 = vunpack.c.l.b16 %v116
    %v140 = vunpack.c.l.b16 %v117
    %v141 = vunpack.c.l.b16 %v118
    %v142 = vunpack.c.l.b16 %v119
    %v143 = vunpack.c.l.b16 %v120
    %v144 = vunpack.c.l.b16 %v121
    %v145 = vunpack.c.l.b16 %v122
    %v146 = vunpack.c.l.b16 %v123
    %v147 = vpack.c.b16 %v140, %v139
    %v148 = vpack.c.b16 %v142, %v141
    %v149 = vpack.c.b16 %v144, %v143
    %v150 = vpack.c.b16 %v146, %v145
    %vm155 = vcmask 523264
    %v157 = vsel %vm155, %v115, 0
    %159 = vmatprep.subr.bf16.mxu0 0
    %160 = vmatpush1.bf16.msra.mxu0 %v147
    %161 = vmatprep.subr.bf16.mxu0 0
    %162 = vmatpush1.bf16.msra.mxu0 %v148
    %163 = vmatprep.subr.bf16.mxu0 0
    %164 = vmatpush1.bf16.msra.mxu0 %v149
    %165 = vmatprep.subr.bf16.mxu0 0
    %166 = vmatpush1.bf16.msra.mxu0 %v150
    %167 = vmatprep.subr.bf16.mxu0 0
    %168 = vmatpush1.bf16.msra.mxu0 0
    %169 = vmatprep.subr.bf16.mxu0 0
    %170 = vmatpush1.bf16.msra.mxu0 0
    %171 = vmatprep.subr.bf16.mxu0 0
    %172 = vmatpush1.bf16.msra.mxu0 0
    %173 = vmatprep.subr.bf16.mxu0 0
    %174 = vmatpush1.bf16.msra.mxu0 0
    %175 = vmatprep.subr.bf16.mxu0 0
    %176 = vmatpush1.bf16.msra.mxu0 0
    %177 = vmatprep.subr.bf16.mxu0 0
    %178 = vmatpush1.bf16.msra.mxu0 0
    %179 = vmatprep.subr.bf16.mxu0 0
    %180 = vmatpush1.bf16.msra.mxu0 0
    %181 = vmatprep.subr.bf16.mxu0 0
    %182 = vmatpush1.bf16.msra.mxu0 0
    %183 = vmatprep.subr.bf16.mxu0 0
    %184 = vmatpush1.bf16.msra.mxu0 0
    %185 = vmatprep.subr.bf16.mxu0 0
    %186 = vmatpush1.bf16.msra.mxu0 0
    %187 = vmatprep.subr.bf16.mxu0 0
    %188 = vmatpush1.bf16.msra.mxu0 0
    %189 = vmatprep.subr.bf16.mxu0 0
    %190 = vmatpush1.bf16.msra.mxu0 0
    %191 = vmatprep.mubr.bf16.mxu0 0
    %192 = vmatmul.mubr.bf16.gmra.mrb[0].mxu0 %v157
    %v193 = vpop.f32.mrb[0].mxu0
    %v194 = vadd.f32 %v129, %v193
    %v195 = vpop.f32.mrb[0].mxu0
    %v196 = vpop.f32.mrb[0].mxu0
    %v197 = vpop.f32.mrb[0].mxu0
    %198 = vdwg.mxu0
    %v199 = vmax.f32 %v194, 0.0
    %v200 = vpack.c.bf16 %v199, %v199
    %v201 = vld [vmem:[#allocation8] sm:$0xf]
    %v202 = vld [vmem:[#allocation8 + $0x4] sm:$0xf]
    %v203 = vld [vmem:[#allocation8 + $0x8] sm:$0xf]
    %v204 = vld [vmem:[#allocation8 + $0xc] sm:$0xf]
    %v205 = vld [vmem:[#allocation8 + $0x10] sm:$0xf]
    %v206 = vld [vmem:[#allocation8 + $0x14] sm:$0xf]
    %v207 = vld [vmem:[#allocation8 + $0x18] sm:$0xf]
    %v208 = vld [vmem:[#allocation8 + $0x1c] sm:$0xf]
    %v209 = vld [vmem:[#allocation8 + $0x20] sm:$0xf]
    %v210 = vld [vmem:[#allocation8 + $0x24] sm:$0xf]
    %v211 = vld [vmem:[#allocation8 + $0x28] sm:$0xf]
    %v212 = vld [vmem:[#allocation8 + $0x2c] sm:$0xf]
    %v213 = vld [vmem:[#allocation8 + $0x30] sm:$0xf]
    %v214 = vld [vmem:[#allocation8 + $0x34] sm:$0xf]
    %v215 = vld [vmem:[#allocation8 + $0x38] sm:$0xf]
    %v216 = vld [vmem:[#allocation8 + $0x3c] sm:$0xf]
    %v217 = vld [vmem:[#allocation10] sm:$0x1]
    %v219 = vlaneseq
    %v220 = vshrl.u32 %v219, 7
    %v221 = vsub.s32 0, %v220
    %v222 = vrot.slane %v217, %v221
    %v240 = vunpack.c.l.b16 %v201
    %v241 = vunpack.c.l.b16 %v202
    %v242 = vunpack.c.l.b16 %v203
    %v243 = vunpack.c.l.b16 %v204
    %v244 = vunpack.c.l.b16 %v205
    %v245 = vunpack.c.l.b16 %v206
    %v246 = vunpack.c.l.b16 %v207
    %v247 = vunpack.c.l.b16 %v208
    %v248 = vunpack.c.l.b16 %v209
    %v249 = vunpack.c.l.b16 %v210
    %v250 = vunpack.c.l.b16 %v211
    %v251 = vunpack.c.l.b16 %v212
    %v252 = vunpack.c.l.b16 %v213
    %v253 = vunpack.c.l.b16 %v214
    %v254 = vunpack.c.l.b16 %v215
    %v255 = vunpack.c.l.b16 %v216
    %v256 = vpack.c.b16 %v241, %v240
    %v257 = vpack.c.b16 %v243, %v242
    %v258 = vpack.c.b16 %v245, %v244
    %v259 = vpack.c.b16 %v247, %v246
    %v260 = vpack.c.b16 %v249, %v248
    %v261 = vpack.c.b16 %v251, %v250
    %v262 = vpack.c.b16 %v253, %v252
    %v263 = vpack.c.b16 %v255, %v254
    %272 = vmatprep.subr.bf16.mxu0 0
    %273 = vmatpush1.bf16.msra.mxu0 %v256
    %274 = vmatprep.subr.bf16.mxu0 0
    %275 = vmatpush1.bf16.msra.mxu0 %v257
    %276 = vmatprep.subr.bf16.mxu0 0
    %277 = vmatpush1.bf16.msra.mxu0 %v258
    %278 = vmatprep.subr.bf16.mxu0 0
    %279 = vmatpush1.bf16.msra.mxu0 %v259
    %280 = vmatprep.subr.bf16.mxu0 0
    %281 = vmatpush1.bf16.msra.mxu0 %v260
    %282 = vmatprep.subr.bf16.mxu0 0
    %283 = vmatpush1.bf16.msra.mxu0 %v261
    %284 = vmatprep.subr.bf16.mxu0 0
    %285 = vmatpush1.bf16.msra.mxu0 %v262
    %286 = vmatprep.subr.bf16.mxu0 0
    %287 = vmatpush1.bf16.msra.mxu0 %v263
    %288 = vmatprep.subr.bf16.mxu0 0
    %289 = vmatpush1.bf16.msra.mxu0 0
    %290 = vmatprep.subr.bf16.mxu0 0
    %291 = vmatpush1.bf16.msra.mxu0 0
    %292 = vmatprep.subr.bf16.mxu0 0
    %293 = vmatpush1.bf16.msra.mxu0 0
    %294 = vmatprep.subr.bf16.mxu0 0
    %295 = vmatpush1.bf16.msra.mxu0 0
    %296 = vmatprep.subr.bf16.mxu0 0
    %297 = vmatpush1.bf16.msra.mxu0 0
    %298 = vmatprep.subr.bf16.mxu0 0
    %299 = vmatpush1.bf16.msra.mxu0 0
    %300 = vmatprep.subr.bf16.mxu0 0
    %301 = vmatpush1.bf16.msra.mxu0 0
    %302 = vmatprep.subr.bf16.mxu0 0
    %303 = vmatpush1.bf16.msra.mxu0 0
    %304 = vmatprep.mubr.bf16.mxu0 0
    %305 = vmatmul.mubr.bf16.gmra.mrb[0].mxu0 %v200
    %v306 = vpop.f32.mrb[0].mxu0
    %v307 = vadd.f32 %v222, %v306
    %v308 = vpop.f32.mrb[0].mxu0
    %v309 = vpop.f32.mrb[0].mxu0
    %v310 = vpop.f32.mrb[0].mxu0
    %311 = vdwg.mxu0
    %v312 = vmax.f32 %v307, 0.0
    %v313 = vpack.c.bf16 %v312, %v312
    %v314 = vld [vmem:[#allocation11] sm:$0xf]
    %v315 = vld [vmem:[#allocation11 + $0x4] sm:$0xf]
    %v316 = vld [vmem:[#allocation11 + $0x8] sm:$0xf]
    %v317 = vld [vmem:[#allocation11 + $0xc] sm:$0xf]
    %v318 = vld [vmem:[#allocation11 + $0x10] sm:$0xf]
    %v319 = vld [vmem:[#allocation11 + $0x14] sm:$0xf]
    %v320 = vld [vmem:[#allocation11 + $0x18] sm:$0xf]
    %v321 = vld [vmem:[#allocation11 + $0x1c] sm:$0xf]
    %v322 = vld [vmem:[#allocation13] sm:$0x1]
    %v324 = vlaneseq
    %v325 = vshrl.u32 %v324, 7
    %v326 = vsub.s32 0, %v325
    %v327 = vrot.slane %v322, %v326
    %v337 = vunpack.c.l.b16 %v314
    %v338 = vunpack.c.l.b16 %v315
    %v339 = vunpack.c.l.b16 %v316
    %v340 = vunpack.c.l.b16 %v317
    %v341 = vunpack.c.l.b16 %v318
    %v342 = vunpack.c.l.b16 %v319
    %v343 = vunpack.c.l.b16 %v320
    %v344 = vunpack.c.l.b16 %v321
    %v345 = vpack.c.b16 %v338, %v337
    %v346 = vpack.c.b16 %v340, %v339
    %v347 = vpack.c.b16 %v342, %v341
    %v348 = vpack.c.b16 %v344, %v343
    %v354 = vsel %vm155, %v313, 0
    %356 = vmatprep.subr.bf16.mxu0 0
    %357 = vmatpush1.bf16.msra.mxu0 %v345
    %358 = vmatprep.subr.bf16.mxu0 0
    %359 = vmatpush1.bf16.msra.mxu0 %v346
    %360 = vmatprep.subr.bf16.mxu0 0
    %361 = vmatpush1.bf16.msra.mxu0 %v347
    %362 = vmatprep.subr.bf16.mxu0 0
    %363 = vmatpush1.bf16.msra.mxu0 %v348
    %364 = vmatprep.subr.bf16.mxu0 0
    %365 = vmatpush1.bf16.msra.mxu0 0
    %366 = vmatprep.subr.bf16.mxu0 0
    %367 = vmatpush1.bf16.msra.mxu0 0
    %368 = vmatprep.subr.bf16.mxu0 0
    %369 = vmatpush1.bf16.msra.mxu0 0
    %370 = vmatprep.subr.bf16.mxu0 0
    %371 = vmatpush1.bf16.msra.mxu0 0
    %372 = vmatprep.subr.bf16.mxu0 0
    %373 = vmatpush1.bf16.msra.mxu0 0
    %374 = vmatprep.subr.bf16.mxu0 0
    %375 = vmatpush1.bf16.msra.mxu0 0
    %376 = vmatprep.subr.bf16.mxu0 0
    %377 = vmatpush1.bf16.msra.mxu0 0
    %378 = vmatprep.subr.bf16.mxu0 0
    %379 = vmatpush1.bf16.msra.mxu0 0
    %380 = vmatprep.subr.bf16.mxu0 0
    %381 = vmatpush1.bf16.msra.mxu0 0
    %382 = vmatprep.subr.bf16.mxu0 0
    %383 = vmatpush1.bf16.msra.mxu0 0
    %384 = vmatprep.subr.bf16.mxu0 0
    %385 = vmatpush1.bf16.msra.mxu0 0
    %386 = vmatprep.subr.bf16.mxu0 0
    %387 = vmatpush1.bf16.msra.mxu0 0
    %388 = vmatprep.mubr.bf16.mxu0 0
    %389 = vmatmul.mubr.bf16.gmra.mrb[0].mxu0 %v354
    %v390 = vpop.f32.mrb[0].mxu0
    %v391 = vadd.f32 %v327, %v390
    %v392 = vpop.f32.mrb[0].mxu0
    %v393 = vpop.f32.mrb[0].mxu0
    %v394 = vpop.f32.mrb[0].mxu0
    %395 = vdwg.mxu0
    %396 = vst [vmem:[#allocation14] sm:$0xff] %v391
    // Predicated region
    $region58: #{combined_model_forward.1} parent=1 // pred_check
      _
    $region59: #{combined_model_forward.1} parent=1 // pred_check_branch
      %398 = sbr.rel (0) target = $region61
    $region60: #{combined_model_forward.1} parent=1 // pred_region
      %s400 = ssub.s32 128, 128
      %401 = vsyncadd [#allocation4], %s400
      %s403 = sshll.u32 [#allocation14], 4
      %s404 = int_to_ptr.vmem [resolvable:$true] %s403
      %406 = dma.vmem_to_hbm [thread:$0]  %s404, 128, %s7, [#allocation4]
    $region61: #{combined_model_forward.1} parent=1 // pred_fallthru
      _
    // Predicated region
    $region62: #{combined_model_forward.1} parent=1 // pred_check
      _
    $region63: #{combined_model_forward.1} parent=1 // pred_check_branch
      %408 = sbr.rel (0) target = $region65
    $region64: #{combined_model_forward.1} parent=1 // pred_region
      %409 = dma.done [#allocation4], 128
    $region65: #{combined_model_forward.1} parent=1 // pred_fallthru
      _
    %410 = vsyncpa [#allocation3], 1
    %411 = vsyncpa [#allocation6], 1
    %412 = vsyncpa [#allocation9], 1
    %413 = vsyncpa [#allocation12], 1
    %414 = vsyncpa [#allocation4], 1

</llo_original>
